<compile_context>
chip_gen: v6e
topology: v6e:2x2x1
jax: 0.10.0
libtpu: 0.0.40
codegen_flags: <defaults>
</compile_context>

<pallas_src>
import functools
import math

import jax
import jax.numpy as jnp
from jax import lax
from jax.experimental import pallas as pl
from jax.experimental.pallas import tpu as pltpu

_NEG_BIG = -1e30   # finite "-inf" as a *Python float* (never a captured const)


def _label_moco_kernel(q_ref, k_ref, qkt_ref, label_ref, qlabel_ref, loss_ref,
                       qsc_sc, lpos_sc, m_sc, s_sc, nmask_sc, mlneg_sc,
                       *, inv_T, K_actual, block_k, chunk_k, k_padded):
    kt = pl.program_id(1)
    last_kt = pl.num_programs(1) - 1
    n_chunks = block_k // chunk_k

    # ---- K-invariant work: only on the first K step of each N tile --------
    @pl.when(kt == 0)
    def _():
        q_scaled = q_ref[...] * inv_T                          # (bn, C)
        qsc_sc[...] = q_scaled.astype(qsc_sc.dtype)
        lpos = jnp.sum(
            q_scaled.astype(jnp.float32) * k_ref[...].astype(jnp.float32),
            axis=-1, keepdims=True)                            # (bn, 1)
        lpos_sc[...] = lpos
        # Seed the online logsumexp with the positive logit.
        m_sc[...] = lpos
        s_sc[...] = jnp.ones_like(s_sc)
        nmask_sc[...] = jnp.zeros_like(nmask_sc)
        mlneg_sc[...] = jnp.zeros_like(mlneg_sc)

    q_scaled = qsc_sc[...]                                     # (bn, C)

    def step(c, masked):
        off = c * chunk_k
        if not isinstance(off, int):
            off = pl.multiple_of(off, chunk_k)
        qk_tile = qkt_ref[:, pl.ds(off, chunk_k)]              # (C, ck)
        # Plain NN matmul (queue pre-transposed in the wrapper).
        l_neg = jnp.dot(q_scaled, qk_tile,
                        preferred_element_type=jnp.float32)    # (bn, ck)
        eq = label_ref[...] == qlabel_ref[:, pl.ds(off, chunk_k)]  # (bn, ck)
        if masked:
            # Only traced/run on the boundary K tile (handles K padding).
            col = (kt * block_k + off
                   + lax.broadcasted_iota(jnp.int32, (1, chunk_k), 1))
            valid = col < K_actual
            mask = jnp.logical_and(eq, valid).astype(jnp.float32)
            l_neg_v = jnp.where(valid, l_neg, _NEG_BIG)
        else:
            mask = eq.astype(jnp.float32)
            l_neg_v = l_neg
        # Online logsumexp update over this chunk.
        m_prev = m_sc[...]
        m_new = jnp.maximum(m_prev, jnp.max(l_neg_v, axis=-1, keepdims=True))
        s_sc[...] = (s_sc[...] * jnp.exp(m_prev - m_new)
                     + jnp.sum(jnp.exp(l_neg_v - m_new), axis=-1,
                               keepdims=True))
        m_sc[...] = m_new
        # Running sums for the fused masked-logprob numerator.
        nmask_sc[...] = nmask_sc[...] + jnp.sum(mask, axis=-1, keepdims=True)
        mlneg_sc[...] = mlneg_sc[...] + jnp.sum(mask * l_neg, axis=-1,
                                                keepdims=True)

    def process(masked):
        if n_chunks == 1:
            step(0, masked)
        else:
            def body(c, carry):
                step(c, masked)
                return carry
            lax.fori_loop(0, n_chunks, body, 0, unroll=True)

    if k_padded:
        # Padding only lives in the last K tile; interior tiles skip the
        # iota/where/logical_and work entirely.
        @pl.when(kt != last_kt)
        def _():
            process(masked=False)

        @pl.when(kt == last_kt)
        def _():
            process(masked=True)
    else:
        process(masked=False)

    # ---- finalize on the last K step ---------------------------------------
    @pl.when(kt == last_kt)
    def _():
        lse = m_sc[...] + jnp.log(s_sc[...])                   # (bn, 1)
        sm = nmask_sc[...]                                     # (bn, 1)
        # -[(l_pos - lse) + sum(mask*l_neg) - lse*sum(mask)] / (1 + sum(mask))
        numer = (lpos_sc[...] - lse) + mlneg_sc[...] - lse * sm
        loss_ref[...] = (-numer / (1.0 + sm)).astype(loss_ref.dtype)


def _round_up(x, m):
    return ((x + m - 1) // m) * m


def label_moco_loss(q, k, label, q_k, q_label, T, *,
                    block_n=256, block_k=2048, queue_buffers=None):
    """q: (N, C), k: (N, C), label: (N,), q_k: (K, C), q_label: (K,)."""
    N, C = q.shape
    K = q_k.shape[0]

    # ---- tile sizes --------------------------------------------------------
    n_ru8 = _round_up(N, 8)
    bn = min(block_n, n_ru8)
    # v7x has 2 TensorCores; only the "parallel" N axis shards across them,
    # so prefer >= 2 N tiles whenever N allows it.
    if bn >= n_ru8 and n_ru8 > 8:
        bn = _round_up((n_ru8 + 1) // 2, 8)
    bk = min(block_k, _round_up(K, 128))
    assert bn % 8 == 0 and bk % 128 == 0
    ck = math.gcd(bk, 512)           # in-kernel sub-chunk of the K DMA tile
    n_pad = _round_up(N, bn)
    k_pad = _round_up(K, bk)

    # ---- padding -----------------------------------------------------------
    if n_pad != N:
        q = jnp.pad(q, ((0, n_pad - N), (0, 0)))
        k = jnp.pad(k, ((0, n_pad - N), (0, 0)))
        label = jnp.pad(label, (0, n_pad - N))
    if k_pad != K:
        q_k = jnp.pad(q_k, ((0, k_pad - K), (0, 0)))
        q_label = jnp.pad(q_label, (0, k_pad - K))

    # One-time queue transpose -> (C, K): in-kernel matmul is a plain NN
    # matmul (lane dim = K tile), no per-step relayout of the queue tile.
    qk_t = jnp.transpose(q_k, (1, 0))

    label2d = label.reshape(n_pad, 1).astype(jnp.int32)
    qlabel2d = q_label.reshape(1, k_pad).astype(jnp.int32)

    kernel = functools.partial(
        _label_moco_kernel, inv_T=1.0 / float(T), K_actual=K,
        block_k=bk, chunk_k=ck, k_padded=(k_pad != K))

    itemsize = jnp.dtype(q.dtype).itemsize
    n_tiles = n_pad // bn
    cost = pl.CostEstimate(
        flops=2 * n_pad * k_pad * C + 2 * n_pad * C + 8 * n_pad * k_pad,
        transcendentals=n_pad * k_pad + 4 * n_pad * (k_pad // bk),
        # Queue is re-streamed once per N tile; q/k/labels are read once.
        bytes_accessed=(2 * n_pad * C + n_tiles * k_pad * C) * itemsize
        + 4 * (n_pad + n_tiles * k_pad) + 4 * n_pad,
    )

    # VMEM budget derived from the chosen tiles (not hardcoded).  For the
    # defaults this stays at the 32 MiB floor (safe on v5e/v6e/v7x); grows
    # (capped) only if the user picks much larger tiles.
    vmem_est = int(
        2 * 2 * bn * C * itemsize            # q, k tiles (double-buffered)
        + 2 * C * bk * itemsize              # queue tile (double-buffered)
        + 2 * 4 * (bn + bk)                  # label tiles
        + 2 * 4 * bn                         # output tile
        + bn * C * itemsize + 5 * 4 * bn     # VMEM scratch
        + 8 * bn * ck * 4                    # live (bn, ck) f32 temporaries
    )
    vmem_limit = max(32 * 1024 * 1024, min(2 * vmem_est, 96 * 1024 * 1024))

    qk_spec_kwargs = {}
    if queue_buffers is not None:            # e.g. 3 on v5e to hide queue DMA
        qk_spec_kwargs["pipeline_mode"] = pl.Buffered(queue_buffers)

    grid = (n_tiles, k_pad // bk)
    per_row = pl.pallas_call(
        kernel,
        out_shape=jax.ShapeDtypeStruct((n_pad, 1), jnp.float32),
        grid_spec=pltpu.PrefetchScalarGridSpec(
            num_scalar_prefetch=0,
            grid=grid,
            in_specs=[
                pl.BlockSpec((bn, C), lambda i, j: (i, 0)),    # q
                pl.BlockSpec((bn, C), lambda i, j: (i, 0)),    # k
                pl.BlockSpec((C, bk), lambda i, j: (0, j),     # q_k^T streamed
                             **qk_spec_kwargs),
                pl.BlockSpec((bn, 1), lambda i, j: (i, 0)),    # label
                pl.BlockSpec((1, bk), lambda i, j: (0, j)),    # q_label
            ],
            out_specs=pl.BlockSpec((bn, 1), lambda i, j: (i, 0)),
            scratch_shapes=[
                pltpu.VMEM((bn, C), q.dtype),        # q * (1/T), hoisted
                pltpu.VMEM((bn, 1), jnp.float32),    # l_pos
                pltpu.VMEM((bn, 1), jnp.float32),    # running max m
                pltpu.VMEM((bn, 1), jnp.float32),    # running sum-exp s
                pltpu.VMEM((bn, 1), jnp.float32),    # running sum(mask)
                pltpu.VMEM((bn, 1), jnp.float32),    # running sum(mask*l_neg)
            ],
        ),
        compiler_params=pltpu.CompilerParams(
            dimension_semantics=("parallel", "arbitrary"),
            vmem_limit_bytes=vmem_limit,
        ),
        cost_estimate=cost,
    )(q, k, qk_t, label2d, qlabel2d)

    # Mean over the true N rows in the wrapper (padded rows sliced off here;
    # keeps the N axis parallel and the kernel output per-tile).
    return jnp.mean(per_row[:N, 0])


def _label_moco_loss_ref(q, k, label, q_k, q_label, T):
    """Pure-JAX reference for validation."""
    q = q.astype(jnp.float32)
    k = k.astype(jnp.float32)
    q_k = q_k.astype(jnp.float32)
    l_pos = jnp.sum(q * k, axis=-1, keepdims=True)            # (N, 1)
    l_neg = q @ q_k.T                                         # (N, K)
    logits = jnp.concatenate([l_pos, l_neg], axis=1) / T      # (N, 1+K)
    mask = jnp.concatenate(
        [jnp.ones((q.shape[0], 1), jnp.float32),
         (label[:, None] == q_label[None, :]).astype(jnp.float32)], axis=1)
    logp = logits - jax.scipy.special.logsumexp(logits, axis=1, keepdims=True)
    per_row = -(mask * logp).sum(1) / mask.sum(1)
    return per_row.mean()


if __name__ == "__main__":
    T = 0.07

    def make(key, N, C, K):
        kq, kk, kqueue, kl, kql = jax.random.split(key, 5)
        q = jax.random.normal(kq, (N, C), jnp.float32)
        q = q / jnp.linalg.norm(q, axis=-1, keepdims=True)
        k = jax.random.normal(kk, (N, C), jnp.float32)
        k = k / jnp.linalg.norm(k, axis=-1, keepdims=True)
        q_k = jax.random.normal(kqueue, (K, C), jnp.float32)
        q_k = q_k / jnp.linalg.norm(q_k, axis=-1, keepdims=True)
        label = jax.random.randint(kl, (N,), 0, 4, jnp.int32)
        q_label = jax.random.randint(kql, (K,), 0, 4, jnp.int32)
        return q, k, label, q_k, q_label

    # Case 1: tile-aligned shapes, multi-tile grid (2 N-tiles x 2 K-tiles).
    args1 = make(jax.random.PRNGKey(0), 16, 128, 512)
    out1 = jax.block_until_ready(
        label_moco_loss(*args1, T, block_n=8, block_k=256))
    ref1 = jax.block_until_ready(_label_moco_loss_ref(*args1, T))
    assert jnp.isfinite(out1), "case1: loss is not finite"
    assert jnp.allclose(out1, ref1, rtol=1e-3, atol=1e-3), (out1, ref1)

    # Case 2: ragged shapes exercising N/K padding + boundary-tile masking.
    args2 = make(jax.random.PRNGKey(1), 13, 32, 200)
    out2 = jax.block_until_ready(
        label_moco_loss(*args2, T, block_n=8, block_k=128))
    ref2 = jax.block_until_ready(_label_moco_loss_ref(*args2, T))
    assert jnp.isfinite(out2), "case2: loss is not finite"
    assert jnp.allclose(out2, ref2, rtol=1e-3, atol=1e-3), (out2, ref2)

    # Case 3: large K tile with multiple in-kernel sub-chunks (fori path)
    # plus N/K padding and the masked boundary tile.
    args3 = make(jax.random.PRNGKey(2), 24, 64, 1100)
    out3 = jax.block_until_ready(
        label_moco_loss(*args3, T, block_n=16, block_k=1024))
    ref3 = jax.block_until_ready(_label_moco_loss_ref(*args3, T))
    assert jnp.isfinite(out3), "case3: loss is not finite"
    assert jnp.allclose(out3, ref3, rtol=1e-3, atol=1e-3), (out3, ref3)

    # Case 4: default tile sizes (exercises the bn >=2-tile heuristic and the
    # single-K-tile init/finalize-on-same-step path).
    out4 = jax.block_until_ready(label_moco_loss(*args1, T))
    assert jnp.allclose(out4, ref1, rtol=1e-3, atol=1e-3), (out4, ref1)

    print("KERNEL_OK")
</pallas_src>

<mosaic_0001>
module attributes {stable_mosaic.version = 11 : i64} {
  func.func @_label_moco_kernel(%arg0: i32, %arg1: i32, %arg2: memref<8x128xf32, #tpu.memory_space<vmem>>, %arg3: memref<8x128xf32, #tpu.memory_space<vmem>>, %arg4: memref<128x256xf32, #tpu.memory_space<vmem>>, %arg5: memref<8x1xi32, #tpu.memory_space<vmem>>, %arg6: memref<1x256xi32, #tpu.memory_space<vmem>>, %arg7: memref<8x1xf32, #tpu.memory_space<vmem>>, %arg8: memref<8x128xf32, #tpu.memory_space<vmem>>, %arg9: memref<8x1xf32, #tpu.memory_space<vmem>>, %arg10: memref<8x1xf32, #tpu.memory_space<vmem>>, %arg11: memref<8x1xf32, #tpu.memory_space<vmem>>, %arg12: memref<8x1xf32, #tpu.memory_space<vmem>>, %arg13: memref<8x1xf32, #tpu.memory_space<vmem>>) attributes {dimension_semantics = [#tpu.dimension_semantics<parallel>, #tpu.dimension_semantics<arbitrary>], iteration_bounds = array<i64: 2, 2>, scalar_prefetch = 0 : i64, scratch_operands = 6 : i64, tpu.core_type = #tpu.core_type<tc>, window_params = [{transform_indices = @transform_0, window_bounds = array<i64: 8, 128>}, {transform_indices = @transform_1, window_bounds = array<i64: 8, 128>}, {transform_indices = @transform_2, window_bounds = array<i64: 128, 256>}, {transform_indices = @transform_3, window_bounds = array<i64: 8, 1>}, {transform_indices = @transform_4, window_bounds = array<i64: 1, 256>}, {transform_indices = @transform_5, window_bounds = array<i64: 8, 1>}]} {
    %c0_i32 = arith.constant 0 : i32
    %0 = arith.cmpi eq, %arg1, %c0_i32 : i32
    %1 = arith.extui %0 : i1 to i32
    %c0_i32_0 = arith.constant 0 : i32
    %2 = arith.cmpi ne, %1, %c0_i32_0 : i32
    scf.if %2 {
      %c0_29 = arith.constant 0 : index
      %c0_30 = arith.constant 0 : index
      %43 = vector.load %arg2[%c0_29, %c0_30] : memref<8x128xf32, #tpu.memory_space<vmem>>, vector<8x128xf32>
      %cst_31 = arith.constant 14.2857141 : f32
      %44 = vector.broadcast %cst_31 : f32 to vector<8x128xf32>
      %45 = arith.mulf %43, %44 : vector<8x128xf32>
      %c0_32 = arith.constant 0 : index
      %c0_33 = arith.constant 0 : index
      %46 = vector.load %arg8[%c0_32, %c0_33] : memref<8x128xf32, #tpu.memory_space<vmem>>, vector<8x128xf32>
      tpu.vector_store %arg8[%c0_32, %c0_33], %45 {strides = array<i32>} : memref<8x128xf32, #tpu.memory_space<vmem>>, vector<8x128xf32>,
      %c0_34 = arith.constant 0 : index
      %c0_35 = arith.constant 0 : index
      %47 = vector.load %arg3[%c0_34, %c0_35] : memref<8x128xf32, #tpu.memory_space<vmem>>, vector<8x128xf32>
      %48 = arith.mulf %45, %47 : vector<8x128xf32>
      %cst_36 = arith.constant dense<0.000000e+00> : vector<8xf32>
      %49 = vector.multi_reduction <add>, %48, %cst_36 [1] : vector<8x128xf32> to vector<8xf32>
      %50 = vector.shape_cast %49 : vector<8xf32> to vector<8x1xf32>
      %c0_37 = arith.constant 0 : index
      %c0_38 = arith.constant 0 : index
      %51 = vector.load %arg9[%c0_37, %c0_38] : memref<8x1xf32, #tpu.memory_space<vmem>>, vector<8x1xf32>
      tpu.vector_store %arg9[%c0_37, %c0_38], %50 {strides = array<i32>} : memref<8x1xf32, #tpu.memory_space<vmem>>, vector<8x1xf32>,
      %c0_39 = arith.constant 0 : index
      %c0_40 = arith.constant 0 : index
      %52 = vector.load %arg10[%c0_39, %c0_40] : memref<8x1xf32, #tpu.memory_space<vmem>>, vector<8x1xf32>
      tpu.vector_store %arg10[%c0_39, %c0_40], %50 {strides = array<i32>} : memref<8x1xf32, #tpu.memory_space<vmem>>, vector<8x1xf32>,
      %cst_41 = arith.constant 1.000000e+00 : f32
      %53 = vector.broadcast %cst_41 : f32 to vector<8x1xf32>
      %c0_42 = arith.constant 0 : index
      %c0_43 = arith.constant 0 : index
      %54 = vector.load %arg11[%c0_42, %c0_43] : memref<8x1xf32, #tpu.memory_space<vmem>>, vector<8x1xf32>
      tpu.vector_store %arg11[%c0_42, %c0_43], %53 {strides = array<i32>} : memref<8x1xf32, #tpu.memory_space<vmem>>, vector<8x1xf32>,
      %cst_44 = arith.constant 0.000000e+00 : f32
      %55 = vector.broadcast %cst_44 : f32 to vector<8x1xf32>
      %c0_45 = arith.constant 0 : index
      %c0_46 = arith.constant 0 : index
      %56 = vector.load %arg12[%c0_45, %c0_46] : memref<8x1xf32, #tpu.memory_space<vmem>>, vector<8x1xf32>
      tpu.vector_store %arg12[%c0_45, %c0_46], %55 {strides = array<i32>} : memref<8x1xf32, #tpu.memory_space<vmem>>, vector<8x1xf32>,
      %cst_47 = arith.constant 0.000000e+00 : f32
      %57 = vector.broadcast %cst_47 : f32 to vector<8x1xf32>
      %c0_48 = arith.constant 0 : index
      %c0_49 = arith.constant 0 : index
      %58 = vector.load %arg13[%c0_48, %c0_49] : memref<8x1xf32, #tpu.memory_space<vmem>>, vector<8x1xf32>
      tpu.vector_store %arg13[%c0_48, %c0_49], %57 {strides = array<i32>} : memref<8x1xf32, #tpu.memory_space<vmem>>, vector<8x1xf32>,
    } else {
    }
    %c0 = arith.constant 0 : index
    %c0_1 = arith.constant 0 : index
    %3 = vector.load %arg8[%c0, %c0_1] : memref<8x128xf32, #tpu.memory_space<vmem>>, vector<8x128xf32>
    %c0_2 = arith.constant 0 : index
    %c0_3 = arith.constant 0 : index
    %4 = vector.load %arg4[%c0_2, %c0_3] : memref<128x256xf32, #tpu.memory_space<vmem>>, vector<128x256xf32>
    %cst = arith.constant dense<0.000000e+00> : vector<8x256xf32>
    %5 = tpu.matmul %3, %4, %cst {dimension_numbers = #tpu.dot_dimension_numbers<[1], [0], [0], [1], [0, 0, 1, 1], [], []>} : vector<8x128xf32>, vector<128x256xf32>, vector<8x256xf32> -> vector<8x256xf32>
    %c0_4 = arith.constant 0 : index
    %c0_5 = arith.constant 0 : index
    %6 = vector.load %arg5[%c0_4, %c0_5] : memref<8x1xi32, #tpu.memory_space<vmem>>, vector<8x1xi32>
    %c0_6 = arith.constant 0 : index
    %c0_7 = arith.constant 0 : index
    %7 = vector.load %arg6[%c0_6, %c0_7] : memref<1x256xi32, #tpu.memory_space<vmem>>, vector<1x256xi32>
    %8 = vector.broadcast %6 : vector<8x1xi32> to vector<8x256xi32>
    %9 = vector.broadcast %7 : vector<1x256xi32> to vector<8x256xi32>
    %10 = arith.cmpi eq, %8, %9 : vector<8x256xi32>
    %11 = arith.extui %10 : vector<8x256xi1> to vector<8x256xi32>
    %12 = arith.sitofp %11 : vector<8x256xi32> to vector<8x256xf32>
    %c0_8 = arith.constant 0 : index
    %c0_9 = arith.constant 0 : index
    %13 = vector.load %arg10[%c0_8, %c0_9] : memref<8x1xf32, #tpu.memory_space<vmem>>, vector<8x1xf32>
    %cst_10 = arith.constant dense<0xFF800000> : vector<8xf32>
    %14 = vector.multi_reduction <maximumf>, %5, %cst_10 [1] : vector<8x256xf32> to vector<8xf32>
    %15 = vector.shape_cast %14 : vector<8xf32> to vector<8x1xf32>
    %16 = arith.maximumf %13, %15 : vector<8x1xf32>
    %c0_11 = arith.constant 0 : index
    %c0_12 = arith.constant 0 : index
    %17 = vector.load %arg11[%c0_11, %c0_12] : memref<8x1xf32, #tpu.memory_space<vmem>>, vector<8x1xf32>
    %18 = arith.subf %13, %16 : vector<8x1xf32>
    %19 = math.exp %18 : vector<8x1xf32>
    %20 = arith.mulf %17, %19 : vector<8x1xf32>
    %21 = vector.broadcast %16 : vector<8x1xf32> to vector<8x256xf32>
    %22 = arith.subf %5, %21 : vector<8x256xf32>
    %23 = math.exp %22 : vector<8x256xf32>
    %cst_13 = arith.constant dense<0.000000e+00> : vector<8xf32>
    %24 = vector.multi_reduction <add>, %23, %cst_13 [1] : vector<8x256xf32> to vector<8xf32>
    %25 = vector.shape_cast %24 : vector<8xf32> to vector<8x1xf32>
    %26 = arith.addf %20, %25 : vector<8x1xf32>
    %c0_14 = arith.constant 0 : index
    %c0_15 = arith.constant 0 : index
    %27 = vector.load %arg11[%c0_14, %c0_15] : memref<8x1xf32, #tpu.memory_space<vmem>>, vector<8x1xf32>
    tpu.vector_store %arg11[%c0_14, %c0_15], %26 {strides = array<i32>} : memref<8x1xf32, #tpu.memory_space<vmem>>, vector<8x1xf32>,
    %c0_16 = arith.constant 0 : index
    %c0_17 = arith.constant 0 : index
    %28 = vector.load %arg10[%c0_16, %c0_17] : memref<8x1xf32, #tpu.memory_space<vmem>>, vector<8x1xf32>
    tpu.vector_store %arg10[%c0_16, %c0_17], %16 {strides = array<i32>} : memref<8x1xf32, #tpu.memory_space<vmem>>, vector<8x1xf32>,
    %c0_18 = arith.constant 0 : index
    %c0_19 = arith.constant 0 : index
    %29 = vector.load %arg12[%c0_18, %c0_19] : memref<8x1xf32, #tpu.memory_space<vmem>>, vector<8x1xf32>
    %cst_20 = arith.constant dense<0.000000e+00> : vector<8xf32>
    %30 = vector.multi_reduction <add>, %12, %cst_20 [1] : vector<8x256xf32> to vector<8xf32>
    %31 = vector.shape_cast %30 : vector<8xf32> to vector<8x1xf32>
    %32 = arith.addf %29, %31 : vector<8x1xf32>
    %c0_21 = arith.constant 0 : index
    %c0_22 = arith.constant 0 : index
    %33 = vector.load %arg12[%c0_21, %c0_22] : memref<8x1xf32, #tpu.memory_space<vmem>>, vector<8x1xf32>
    tpu.vector_store %arg12[%c0_21, %c0_22], %32 {strides = array<i32>} : memref<8x1xf32, #tpu.memory_space<vmem>>, vector<8x1xf32>,
    %c0_23 = arith.constant 0 : index
    %c0_24 = arith.constant 0 : index
    %34 = vector.load %arg13[%c0_23, %c0_24] : memref<8x1xf32, #tpu.memory_space<vmem>>, vector<8x1xf32>
    %35 = arith.mulf %12, %5 : vector<8x256xf32>
    %cst_25 = arith.constant dense<0.000000e+00> : vector<8xf32>
    %36 = vector.multi_reduction <add>, %35, %cst_25 [1] : vector<8x256xf32> to vector<8xf32>
    %37 = vector.shape_cast %36 : vector<8xf32> to vector<8x1xf32>
    %38 = arith.addf %34, %37 : vector<8x1xf32>
    %c0_26 = arith.constant 0 : index
    %c0_27 = arith.constant 0 : index
    %39 = vector.load %arg13[%c0_26, %c0_27] : memref<8x1xf32, #tpu.memory_space<vmem>>, vector<8x1xf32>
    tpu.vector_store %arg13[%c0_26, %c0_27], %38 {strides = array<i32>} : memref<8x1xf32, #tpu.memory_space<vmem>>, vector<8x1xf32>,
    %c1_i32 = arith.constant 1 : i32
    %40 = arith.cmpi eq, %arg1, %c1_i32 : i32
    %41 = arith.extui %40 : i1 to i32
    %c0_i32_28 = arith.constant 0 : i32
    %42 = arith.cmpi ne, %41, %c0_i32_28 : i32
    scf.if %42 {
      %c0_29 = arith.constant 0 : index
      %c0_30 = arith.constant 0 : index
      %43 = vector.load %arg10[%c0_29, %c0_30] : memref<8x1xf32, #tpu.memory_space<vmem>>, vector<8x1xf32>
      %c0_31 = arith.constant 0 : index
      %c0_32 = arith.constant 0 : index
      %44 = vector.load %arg11[%c0_31, %c0_32] : memref<8x1xf32, #tpu.memory_space<vmem>>, vector<8x1xf32>
      %45 = math.log %44 : vector<8x1xf32>
      %46 = arith.addf %43, %45 : vector<8x1xf32>
      %c0_33 = arith.constant 0 : index
      %c0_34 = arith.constant 0 : index
      %47 = vector.load %arg12[%c0_33, %c0_34] : memref<8x1xf32, #tpu.memory_space<vmem>>, vector<8x1xf32>
      %c0_35 = arith.constant 0 : index
      %c0_36 = arith.constant 0 : index
      %48 = vector.load %arg9[%c0_35, %c0_36] : memref<8x1xf32, #tpu.memory_space<vmem>>, vector<8x1xf32>
      %49 = arith.subf %48, %46 : vector<8x1xf32>
      %c0_37 = arith.constant 0 : index
      %c0_38 = arith.constant 0 : index
      %50 = vector.load %arg13[%c0_37, %c0_38] : memref<8x1xf32, #tpu.memory_space<vmem>>, vector<8x1xf32>
      %51 = arith.addf %49, %50 : vector<8x1xf32>
      %52 = arith.mulf %46, %47 : vector<8x1xf32>
      %53 = arith.subf %51, %52 : vector<8x1xf32>
      %cst_39 = arith.constant 0.000000e+00 : f32
      %54 = vector.broadcast %cst_39 : f32 to vector<8x1xf32>
      %55 = arith.subf %54, %53 : vector<8x1xf32>
      %cst_40 = arith.constant 1.000000e+00 : f32
      %56 = vector.broadcast %cst_40 : f32 to vector<8x1xf32>
      %57 = arith.addf %56, %47 : vector<8x1xf32>
      %58 = arith.divf %55, %57 : vector<8x1xf32>
      %c0_41 = arith.constant 0 : index
      %c0_42 = arith.constant 0 : index
      %59 = vector.load %arg7[%c0_41, %c0_42] : memref<8x1xf32, #tpu.memory_space<vmem>>, vector<8x1xf32>
      tpu.vector_store %arg7[%c0_41, %c0_42], %58 {strides = array<i32>} : memref<8x1xf32, #tpu.memory_space<vmem>>, vector<8x1xf32>,
    } else {
    }
    return
  }
  func.func @transform_0(%arg0: i32, %arg1: i32) -> (i32, i32) {
    %c0_i32 = arith.constant 0 : i32
    %c0_i32_0 = arith.constant 0 : i32
    return %arg0, %c0_i32 : i32, i32
  }
  func.func @transform_1(%arg0: i32, %arg1: i32) -> (i32, i32) {
    %c0_i32 = arith.constant 0 : i32
    %c0_i32_0 = arith.constant 0 : i32
    return %arg0, %c0_i32 : i32, i32
  }
  func.func @transform_2(%arg0: i32, %arg1: i32) -> (i32, i32) {
    %c0_i32 = arith.constant 0 : i32
    %c0_i32_0 = arith.constant 0 : i32
    return %c0_i32, %arg1 : i32, i32
  }
  func.func @transform_3(%arg0: i32, %arg1: i32) -> (i32, i32) {
    %c0_i32 = arith.constant 0 : i32
    %c0_i32_0 = arith.constant 0 : i32
    return %arg0, %c0_i32 : i32, i32
  }
  func.func @transform_4(%arg0: i32, %arg1: i32) -> (i32, i32) {
    %c0_i32 = arith.constant 0 : i32
    %c0_i32_0 = arith.constant 0 : i32
    return %c0_i32, %arg1 : i32, i32
  }
  func.func @transform_5(%arg0: i32, %arg1: i32) -> (i32, i32) {
    %c0_i32 = arith.constant 0 : i32
    %c0_i32_0 = arith.constant 0 : i32
    return %arg0, %c0_i32 : i32, i32
  }
}

</mosaic_0001>

<llo_original>
// kernel: tpu_custom_call.1
$region0: #{tpu_custom_call.1}
  #allocation0 [shape = 'u32[]', space=smem, size = 0x4, offset = 0x4, fixed_abs, tag = 'smem constant byte address 0x4 - core index']
  #allocation1 [shape = 'u32[144,128]{1,0:T(1,128)}', space=vmem, size = 0x12000, scoped, tag = 'internal scratch']
  #allocation2 [shape = 'f32[8,128]{1,0:T(8,128)}', space=vmem, size = 0x1000, scoped, tag = 'scratch operand']
  #allocation3 [shape = 'f32[8,1]{1,0:T(8,128)}', space=vmem, size = 0x1000, scoped, tag = 'scratch operand']
  #allocation4 [shape = 'f32[8,1]{1,0:T(8,128)}', space=vmem, size = 0x1000, scoped, tag = 'scratch operand']
  #allocation5 [shape = 'f32[8,1]{1,0:T(8,128)}', space=vmem, size = 0x1000, scoped, tag = 'scratch operand']
  #allocation6 [shape = 'f32[8,1]{1,0:T(8,128)}', space=vmem, size = 0x1000, scoped, tag = 'scratch operand']
  #allocation7 [shape = 'f32[8,1]{1,0:T(8,128)}', space=vmem, size = 0x1000, scoped, tag = 'scratch operand']
  %s0 = inlined_call_operand.vmem [shape: f32[16,128], index: 0, kind: input, shape index: {}]
  %s1 = inlined_call_operand.hbm [shape: f32[16,128], index: 1, kind: input, shape index: {}]
  %s2 = inlined_call_operand.hbm [shape: f32[128,512], index: 2, kind: input, shape index: {}]
  %s3 = inlined_call_operand.vmem [shape: s32[16,1], index: 3, kind: input, shape index: {}]
  %s4 = inlined_call_operand.vmem [shape: s32[1,512], index: 4, kind: input, shape index: {}]
  %s5 = inlined_call_operand.vmem [shape: f32[16,1], index: 5, kind: output, shape index: {}]
  %s6 = sld [smem:[#allocation0]]
  $region69: #{tpu_custom_call.1} parent=0
    _
  %s8 = ssub.s32 1, %s6
  %s9 = scalar_select 0, %s8, %s6
  $region1: #{tpu_custom_call.1} parent=0
    #allocation8 [shape = 'u8[8192]{0}', space=vmem, size = 0x2000, scoped, tag = 'input window, operand 1']
    #allocation9 [shape = 's32[2]{0}', space=sflag, size = 0x8, scoped, tag = 'scoped memory for tpu_custom_call.1']
    #allocation10 [shape = 'u8[262144]{0}', space=vmem, size = 0x40000, scoped, tag = 'input window, operand 2']
    #allocation11 [shape = 's32[2]{0}', space=sflag, size = 0x8, scoped, tag = 'scoped memory for tpu_custom_call.1']
    %10 = vsyncpa [#allocation9], 0
    %s11 = scalar_lea.sflag [#allocation9], 1
    %12 = vsyncpa %s11, 0
    %13 = vsyncpa [#allocation11], 0
    %s14 = scalar_lea.sflag [#allocation11], 1
    %15 = vsyncpa %s14, 0
    loop: start=0, step=1, limit=6
    $region2: #{tpu_custom_call.1} parent=1 // loop_pre_header
      _
    $region3: #{tpu_custom_call.1} parent=1 // loop_header
      %s17 = sphi 0, %s21
      %p18 = scmp.ge.s32.totalorder %s17, 6
      %s24 = sphi 0, %s36
      %s25 = sphi 0, %s32
      %s26 = sphi 0, %s24
      %s27 = sphi 0, %s25
      %s28 = sphi 0, %s26
      %s29 = sphi 0, %s27
      %s39 = sphi 0, %s41
      %s42 = sphi 0, %s39
      %s43 = sphi 0, %s42
      %s59 = sphi 0, %s43
      %s65 = sphi 0, %s67
      %s68 = sphi 0, %s65
      %s69 = sphi 0, %s68
      %s85 = sphi 0, %s69
      %s91 = sphi 0, %s93
      %s94 = sphi 0, %s91
      %s95 = sphi 0, %s94
      %s111 = sphi 0, %s95
      %s117 = sphi 0, %s119
      %s120 = sphi 0, %s117
      %s121 = sphi 0, %s120
      %s137 = sphi 0, %s121
      %s143 = sphi 0, %s145
      %s146 = sphi 0, %s143
      %s147 = sphi 0, %s146
      %s163 = sphi 0, %s147
      %s169 = sphi 0, %s171
      %s172 = sphi 0, %s169
      %s173 = sphi 0, %s172
      %s189 = sphi 0, %s173
    $region4: #{tpu_custom_call.1} parent=1 // loop_header_branch
      %20 = sbr.rel (%p18) target = $region8
    $region5: #{tpu_custom_call.1} parent=1 // loop_body
      %s22 = ssub.s32 %s17, 1
      %s23 = ssub.s32 %s17, 2
      %s30 = sadd.s32 1, %s25
      %p31 = scmp.ge.s32.totalorder %s30, 2
      %s32 = scalar_select %p31, 0, %s30
      %s33 = sadd.s32 1, %s24
      %s34 = scalar_select %p31, %s33, %s24
      %p35 = scmp.ge.s32.totalorder %s34, 2
      %s36 = scalar_select %p35, 0, %s34
      %s37 = ssub.s32 %s24, %s36
      %p38 = scmp.eq.s32.totalorder %s37, 0
      %s40 = sadd.s32 %s39, 1
      %s41 = scalar_select %p38, %s39, %s40
      %p44 = pneg %p38
      %p45 = scmp.eq.s32.totalorder %s17, 3
      %p46 = por %p44, %p45
      %p47 = scmp.ne.s32.totalorder %s39, %s42
      %p48 = scmp.eq.s32.totalorder %s17, 0
      %p49 = por %p47, %p48
      %p50 = scmp.ne.s32.totalorder %s39, %s42
      %p51 = scmp.eq.s32.totalorder %s22, 3
      %p52 = por %p50, %p51
      %p53 = scmp.ne.s32.totalorder %s42, %s43
      %p54 = scmp.eq.s32.totalorder %s22, 0
      %p55 = por %p53, %p54
      %p56 = scmp.ne.s32.totalorder %s42, %s43
      %p57 = scmp.eq.s32.totalorder %s23, 3
      %p58 = por %p56, %p57
      %p60 = scmp.ne.s32.totalorder %s43, %s59
      %p61 = scmp.eq.s32.totalorder %s23, 0
      %p62 = por %p60, %p61
      %s63 = ssub.s32 %s24, %s36
      %p64 = scmp.eq.s32.totalorder %s63, 0
      %s66 = sadd.s32 %s65, 1
      %s67 = scalar_select %p64, %s65, %s66
      %p70 = pneg %p64
      %p71 = scmp.eq.s32.totalorder %s17, 3
      %p72 = por %p70, %p71
      %p73 = scmp.ne.s32.totalorder %s65, %s68
      %p74 = scmp.eq.s32.totalorder %s17, 0
      %p75 = por %p73, %p74
      %p76 = scmp.ne.s32.totalorder %s65, %s68
      %p77 = scmp.eq.s32.totalorder %s22, 3
      %p78 = por %p76, %p77
      %p79 = scmp.ne.s32.totalorder %s68, %s69
      %p80 = scmp.eq.s32.totalorder %s22, 0
      %p81 = por %p79, %p80
      %p82 = scmp.ne.s32.totalorder %s68, %s69
      %p83 = scmp.eq.s32.totalorder %s23, 3
      %p84 = por %p82, %p83
      %p86 = scmp.ne.s32.totalorder %s69, %s85
      %p87 = scmp.eq.s32.totalorder %s23, 0
      %p88 = por %p86, %p87
      %s89 = ssub.s32 %s25, %s32
      %p90 = scmp.eq.s32.totalorder %s89, 0
      %s92 = sadd.s32 %s91, 1
      %s93 = scalar_select %p90, %s91, %s92
      %p96 = pneg %p90
      %p97 = scmp.eq.s32.totalorder %s17, 3
      %p98 = por %p96, %p97
      %p99 = scmp.ne.s32.totalorder %s91, %s94
      %p100 = scmp.eq.s32.totalorder %s17, 0
      %p101 = por %p99, %p100
      %p102 = scmp.ne.s32.totalorder %s91, %s94
      %p103 = scmp.eq.s32.totalorder %s22, 3
      %p104 = por %p102, %p103
      %p105 = scmp.ne.s32.totalorder %s94, %s95
      %p106 = scmp.eq.s32.totalorder %s22, 0
      %p107 = por %p105, %p106
      %p108 = scmp.ne.s32.totalorder %s94, %s95
      %p109 = scmp.eq.s32.totalorder %s23, 3
      %p110 = por %p108, %p109
      %p112 = scmp.ne.s32.totalorder %s95, %s111
      %p113 = scmp.eq.s32.totalorder %s23, 0
      %p114 = por %p112, %p113
      %s115 = ssub.s32 %s24, %s36
      %p116 = scmp.eq.s32.totalorder %s115, 0
      %s118 = sadd.s32 %s117, 1
      %s119 = scalar_select %p116, %s117, %s118
      %p122 = pneg %p116
      %p123 = scmp.eq.s32.totalorder %s17, 3
      %p124 = por %p122, %p123
      %p125 = scmp.ne.s32.totalorder %s117, %s120
      %p126 = scmp.eq.s32.totalorder %s17, 0
      %p127 = por %p125, %p126
      %p128 = scmp.ne.s32.totalorder %s117, %s120
      %p129 = scmp.eq.s32.totalorder %s22, 3
      %p130 = por %p128, %p129
      %p131 = scmp.ne.s32.totalorder %s120, %s121
      %p132 = scmp.eq.s32.totalorder %s22, 0
      %p133 = por %p131, %p132
      %p134 = scmp.ne.s32.totalorder %s120, %s121
      %p135 = scmp.eq.s32.totalorder %s23, 3
      %p136 = por %p134, %p135
      %p138 = scmp.ne.s32.totalorder %s121, %s137
      %p139 = scmp.eq.s32.totalorder %s23, 0
      %p140 = por %p138, %p139
      %s141 = ssub.s32 %s25, %s32
      %p142 = scmp.eq.s32.totalorder %s141, 0
      %s144 = sadd.s32 %s143, 1
      %s145 = scalar_select %p142, %s143, %s144
      %p148 = pneg %p142
      %p149 = scmp.eq.s32.totalorder %s17, 3
      %p150 = por %p148, %p149
      %p151 = scmp.ne.s32.totalorder %s143, %s146
      %p152 = scmp.eq.s32.totalorder %s17, 0
      %p153 = por %p151, %p152
      %p154 = scmp.ne.s32.totalorder %s143, %s146
      %p155 = scmp.eq.s32.totalorder %s22, 3
      %p156 = por %p154, %p155
      %p157 = scmp.ne.s32.totalorder %s146, %s147
      %p158 = scmp.eq.s32.totalorder %s22, 0
      %p159 = por %p157, %p158
      %p160 = scmp.ne.s32.totalorder %s146, %s147
      %p161 = scmp.eq.s32.totalorder %s23, 3
      %p162 = por %p160, %p161
      %p164 = scmp.ne.s32.totalorder %s147, %s163
      %p165 = scmp.eq.s32.totalorder %s23, 0
      %p166 = por %p164, %p165
      %s167 = ssub.s32 %s24, %s36
      %p168 = scmp.eq.s32.totalorder %s167, 0
      %s170 = sadd.s32 %s169, 1
      %s171 = scalar_select %p168, %s169, %s170
      %p174 = pneg %p168
      %p175 = scmp.eq.s32.totalorder %s17, 3
      %p176 = por %p174, %p175
      %p177 = scmp.ne.s32.totalorder %s169, %s172
      %p178 = scmp.eq.s32.totalorder %s17, 0
      %p179 = por %p177, %p178
      %p180 = scmp.ne.s32.totalorder %s169, %s172
      %p181 = scmp.eq.s32.totalorder %s22, 3
      %p182 = por %p180, %p181
      %p183 = scmp.ne.s32.totalorder %s172, %s173
      %p184 = scmp.eq.s32.totalorder %s22, 0
      %p185 = por %p183, %p184
      %p186 = scmp.ne.s32.totalorder %s172, %s173
      %p187 = scmp.eq.s32.totalorder %s23, 3
      %p188 = por %p186, %p187
      %p190 = scmp.ne.s32.totalorder %s173, %s189
      %p191 = scmp.eq.s32.totalorder %s23, 0
      %p192 = por %p190, %p191
      %p193 = scmp.le.s32.totalorder 1, %s17
      %p194 = scmp.lt.s32.totalorder %s17, 5
      %p195 = pnand %p193, %p194
      %p196 = pneg %p195
      // Predicated region
      $region9: #{tpu_custom_call.1} parent=5 // pred_check
        _
      $region10: #{tpu_custom_call.1} parent=5 // pred_check_branch
        %198 = sbr.rel (%p195) target = $region12
      $region11: #{tpu_custom_call.1} parent=5 // pred_region
        %s199 = ssub.s32 %s17, 1
      $region12: #{tpu_custom_call.1} parent=5 // pred_fallthru
        _
      %p200 = scmp.lt.s32.totalorder %s17, 4
      // Predicated region
      $region13: #{tpu_custom_call.1} parent=5 // pred_check
        %p201 = pneg %p200
      $region14: #{tpu_custom_call.1} parent=5 // pred_check_branch
        %203 = sbr.rel (%p201) target = $region16
      $region15: #{tpu_custom_call.1} parent=5 // pred_region
        // Predicated region
        $region17: #{tpu_custom_call.1} parent=15 // pred_check
          %p204 = pneg %p49
        $region18: #{tpu_custom_call.1} parent=15 // pred_check_branch
          %206 = sbr.rel (%p204) target = $region20
        $region19: #{tpu_custom_call.1} parent=15 // pred_region
          %p207 = scmp.lt.s32.totalorder %s24, 1
          %s208 = scalar_select %p207, %s24, 1
          %s209 = smul.addr %s208, 8
          %s210 = scalar_lea.vmem %s0, %s209
        $region20: #{tpu_custom_call.1} parent=15 // pred_fallthru
          _
        // Predicated region
        $region21: #{tpu_custom_call.1} parent=15 // pred_check
          %p211 = pneg %p75
        $region22: #{tpu_custom_call.1} parent=15 // pred_check_branch
          %213 = sbr.rel (%p211) target = $region24
        $region23: #{tpu_custom_call.1} parent=15 // pred_region
          %s214 = sand.u32 %s65, 1
          %s215 = scalar_lea.sflag [#allocation9], %s214
          %s216 = sand.u32 %s65, 1
          %s217 = smul.addr %s216, 8
          %s218 = scalar_lea.vmem [#allocation8], %s217
          %s220 = ssub.s32 128, 128
          %221 = vsyncadd %s215, %s220
          %s222 = smul.addr %s24, 128
          %s223 = scalar_lea.hbm %s1, %s222
          %s225 = sshll.u32 %s218, 4
          %s226 = int_to_ptr.vmem [resolvable:$true] %s225
          %228 = dma.hbm_to_vmem [thread:$0]  %s223, 128, %s226, %s215
        $region24: #{tpu_custom_call.1} parent=15 // pred_fallthru
          _
        // Predicated region
        $region25: #{tpu_custom_call.1} parent=15 // pred_check
          %p229 = pneg %p101
        $region26: #{tpu_custom_call.1} parent=15 // pred_check_branch
          %231 = sbr.rel (%p229) target = $region28
        $region27: #{tpu_custom_call.1} parent=15 // pred_region
          %s232 = sand.u32 %s91, 1
          %s233 = scalar_lea.sflag [#allocation11], %s232
          %s234 = sand.u32 %s91, 1
          %s235 = smul.addr %s234, 256
          %s236 = scalar_lea.vmem [#allocation10], %s235
          %s237 = smul.u32 2, %s25
          %s239 = ssub.s32 4096, 4096
          %240 = vsyncadd %s233, %s239
          %s241 = smul.addr %s237, 128
          %s242 = scalar_lea.hbm %s2, %s241
          %s243 = sshll.u32 %s236, 4
          %s244 = int_to_ptr.vmem [resolvable:$true] %s243
          %249 = dma.hbm_to_vmem [thread:$0]  %s242, 4096, %s244, %s233, 512, 256, 16
        $region28: #{tpu_custom_call.1} parent=15 // pred_fallthru
          _
        // Predicated region
        $region29: #{tpu_custom_call.1} parent=15 // pred_check
          %p250 = pneg %p127
        $region30: #{tpu_custom_call.1} parent=15 // pred_check_branch
          %252 = sbr.rel (%p250) target = $region32
        $region31: #{tpu_custom_call.1} parent=15 // pred_region
          %p253 = scmp.lt.s32.totalorder %s24, 1
          %s254 = scalar_select %p253, %s24, 1
          %s255 = smul.addr %s254, 8
          %s256 = scalar_lea.vmem %s3, %s255
        $region32: #{tpu_custom_call.1} parent=15 // pred_fallthru
          _
        // Predicated region
        $region33: #{tpu_custom_call.1} parent=15 // pred_check
          %p257 = pneg %p153
        $region34: #{tpu_custom_call.1} parent=15 // pred_check_branch
          %259 = sbr.rel (%p257) target = $region36
        $region35: #{tpu_custom_call.1} parent=15 // pred_region
          %s260 = smul.u32 2, %s25
          %p261 = scmp.lt.s32.totalorder %s260, 3
          %s262 = scalar_select %p261, %s260, 3
          %s263 = scalar_lea.vmem %s4, %s262
          %s264 = smul.u32 2, %s25
        $region36: #{tpu_custom_call.1} parent=15 // pred_fallthru
          _
      $region16: #{tpu_custom_call.1} parent=5 // pred_fallthru
        _
      %p265 = scmp.le.s32.totalorder 1, %s17
      %p266 = scmp.lt.s32.totalorder %s17, 5
      %p267 = pnand %p265, %p266
      %p268 = pneg %p267
      // Predicated region
      $region37: #{tpu_custom_call.1} parent=5 // pred_check
        _
      $region38: #{tpu_custom_call.1} parent=5 // pred_check_branch
        %270 = sbr.rel (%p267) target = $region40
      $region39: #{tpu_custom_call.1} parent=5 // pred_region
        %s271 = ssub.s32 %s17, 1
        %s272 = sand.u32 %s68, 1
        %s273 = scalar_lea.sflag [#allocation9], %s272
        %s274 = sand.u32 %s68, 1
        %s275 = smul.addr %s274, 8
        %s276 = scalar_lea.vmem [#allocation8], %s275
        // Predicated region
        $region41: #{tpu_custom_call.1} parent=39 // pred_check
          %p277 = pneg %p81
        $region42: #{tpu_custom_call.1} parent=39 // pred_check_branch
          %279 = sbr.rel (%p277) target = $region44
        $region43: #{tpu_custom_call.1} parent=39 // pred_region
          %280 = dma.done %s273, 128
        $region44: #{tpu_custom_call.1} parent=39 // pred_fallthru
          _
        %s281 = sand.u32 %s94, 1
        %s282 = scalar_lea.sflag [#allocation11], %s281
        %s283 = sand.u32 %s94, 1
        %s284 = smul.addr %s283, 256
        %s285 = scalar_lea.vmem [#allocation10], %s284
        // Predicated region
        $region45: #{tpu_custom_call.1} parent=39 // pred_check
          %p286 = pneg %p107
        $region46: #{tpu_custom_call.1} parent=39 // pred_check_branch
          %288 = sbr.rel (%p286) target = $region48
        $region47: #{tpu_custom_call.1} parent=39 // pred_region
          %289 = dma.done %s282, 4096
        $region48: #{tpu_custom_call.1} parent=39 // pred_fallthru
          _
        %p290 = scmp.lt.s32.totalorder %s26, 1
        %s291 = scalar_select %p290, %s26, 1
        %s292 = smul.addr %s291, 8
        %s293 = scalar_lea.vmem %s0, %s292
        %p294 = pneg %p55
        %p295 = pneg %p52
        %s296 = sand.u32 %s68, 1
        %s297 = scalar_lea.sflag [#allocation9], %s296
        %s298 = sand.u32 %s68, 1
        %s299 = smul.addr %s298, 8
        %s300 = scalar_lea.vmem [#allocation8], %s299
        %p301 = pneg %p81
        %p302 = pneg %p78
        %s303 = sand.u32 %s94, 1
        %s304 = scalar_lea.sflag [#allocation11], %s303
        %s305 = sand.u32 %s94, 1
        %s306 = smul.addr %s305, 256
        %s307 = scalar_lea.vmem [#allocation10], %s306
        %p308 = pneg %p107
        %p309 = pneg %p104
        %p310 = scmp.lt.s32.totalorder %s26, 1
        %s311 = scalar_select %p310, %s26, 1
        %s312 = smul.addr %s311, 8
        %s313 = scalar_lea.vmem %s3, %s312
        %p314 = pneg %p133
        %p315 = pneg %p130
        %s316 = smul.u32 2, %s27
        %p317 = scmp.lt.s32.totalorder %s316, 3
        %s318 = scalar_select %p317, %s316, 3
        %s319 = scalar_lea.vmem %s4, %s318
        %p320 = pneg %p159
        %p321 = pneg %p156
        %p322 = pneg %p185
        %p323 = pneg %p182
        %p324 = scmp.lt.s32.totalorder %s26, 1
        %s325 = scalar_select %p324, %s26, 1
        %s326 = smul.addr %s325, 8
        %s327 = scalar_lea.vmem %s5, %s326
        %p328 = scmp.lt.s32.totalorder %s26, 1
        %s329 = scalar_select %p328, %s26, 1
        %s330 = smul.addr %s329, 8
        %s331 = scalar_lea.vmem %s0, %s330
        %s332 = smul.u32 2, %s27
        %p333 = scmp.lt.s32.totalorder %s26, 1
        %s334 = scalar_select %p333, %s26, 1
        %s335 = smul.addr %s334, 8
        %s336 = scalar_lea.vmem %s3, %s335
        %s337 = smul.u32 2, %s27
        %p338 = scmp.lt.s32.totalorder %s337, 3
        %s339 = scalar_select %p338, %s337, 3
        %s340 = scalar_lea.vmem %s4, %s339
        %s341 = smul.u32 2, %s27
        %p342 = scmp.lt.s32.totalorder %s26, 1
        %s343 = scalar_select %p342, %s26, 1
        %s344 = smul.addr %s343, 8
        %s345 = scalar_lea.vmem %s5, %s344
        %p346 = scmp.eq.s32.totalorder %s27, 0
        // Predicated region
        $region49: #{tpu_custom_call.1} parent=39 // pred_check
          %p347 = pneg %p346
        $region50: #{tpu_custom_call.1} parent=39 // pred_check_branch
          %349 = sbr.rel (%p347) target = $region52
        $region51: #{tpu_custom_call.1} parent=39 // pred_region
          %v350 = vld [vmem:[%s331] sm:$0xff]
          %v351 = vmul.f32 %v350, 14.285714
          %352 = vst [vmem:[#allocation2] sm:$0xff] %v351
          %v353 = vld [vmem:[%s276] sm:$0xff]
          %v354 = vmul.f32 %v351, %v353
          %355 = vadd.xlane.f32.xlu0 %v354
          %v356 = vpop.xlane.xlu0 %355
          %vm357 = vcmask 7168
          %358 = vst.msk [vmem:[#allocation3] sm:$0xff] %vm357, %v356
          %359 = vst.msk [vmem:[#allocation4] sm:$0xff] %vm357, %v356
          %360 = vst.msk [vmem:[#allocation5] sm:$0xff] %vm357, 1.0
          %361 = vst.msk [vmem:[#allocation6] sm:$0xff] %vm357, 0.0
          %362 = vst.msk [vmem:[#allocation7] sm:$0xff] %vm357, 0.0
        $region52: #{tpu_custom_call.1} parent=39 // pred_fallthru
          _
        %v363 = vld [vmem:[#allocation2] sm:$0xff]
        %v364 = vld [vmem:[%s285] sm:$0xff]
        %v365 = vld [vmem:[%s285 + $0x8] sm:$0xff]
        %v366 = vld [vmem:[%s285 + $0x10] sm:$0xff]
        %v367 = vld [vmem:[%s285 + $0x18] sm:$0xff]
        %v368 = vld [vmem:[%s285 + $0x20] sm:$0xff]
        %v369 = vld [vmem:[%s285 + $0x28] sm:$0xff]
        %v370 = vld [vmem:[%s285 + $0x30] sm:$0xff]
        %v371 = vld [vmem:[%s285 + $0x38] sm:$0xff]
        %v372 = vld [vmem:[%s285 + $0x40] sm:$0xff]
        %v373 = vld [vmem:[%s285 + $0x48] sm:$0xff]
        %v374 = vld [vmem:[%s285 + $0x50] sm:$0xff]
        %v375 = vld [vmem:[%s285 + $0x58] sm:$0xff]
        %v376 = vld [vmem:[%s285 + $0x60] sm:$0xff]
        %v377 = vld [vmem:[%s285 + $0x68] sm:$0xff]
        %v378 = vld [vmem:[%s285 + $0x70] sm:$0xff]
        %v379 = vld [vmem:[%s285 + $0x78] sm:$0xff]
        %v380 = vld [vmem:[%s285 + $0x80] sm:$0xff]
        %v381 = vld [vmem:[%s285 + $0x88] sm:$0xff]
        %v382 = vld [vmem:[%s285 + $0x90] sm:$0xff]
        %v383 = vld [vmem:[%s285 + $0x98] sm:$0xff]
        %v384 = vld [vmem:[%s285 + $0xa0] sm:$0xff]
        %v385 = vld [vmem:[%s285 + $0xa8] sm:$0xff]
        %v386 = vld [vmem:[%s285 + $0xb0] sm:$0xff]
        %v387 = vld [vmem:[%s285 + $0xb8] sm:$0xff]
        %v388 = vld [vmem:[%s285 + $0xc0] sm:$0xff]
        %v389 = vld [vmem:[%s285 + $0xc8] sm:$0xff]
        %v390 = vld [vmem:[%s285 + $0xd0] sm:$0xff]
        %v391 = vld [vmem:[%s285 + $0xd8] sm:$0xff]
        %v392 = vld [vmem:[%s285 + $0xe0] sm:$0xff]
        %v393 = vld [vmem:[%s285 + $0xe8] sm:$0xff]
        %v394 = vld [vmem:[%s285 + $0xf0] sm:$0xff]
        %v395 = vld [vmem:[%s285 + $0xf8] sm:$0xff]
        %396 = vmatprep.subr.mxu0 %v395
        %397 = vmatpush1.msra.mxu0 %v394
        %398 = vmatprep.subr.mxu0 %v393
        %399 = vmatpush1.msra.mxu0 %v392
        %400 = vmatprep.subr.mxu0 %v391
        %401 = vmatpush1.msra.mxu0 %v390
        %402 = vmatprep.subr.mxu0 %v389
        %403 = vmatpush1.msra.mxu0 %v388
        %404 = vmatprep.subr.mxu0 %v387
        %405 = vmatpush1.msra.mxu0 %v386
        %406 = vmatprep.subr.mxu0 %v385
        %407 = vmatpush1.msra.mxu0 %v384
        %408 = vmatprep.subr.mxu0 %v383
        %409 = vmatpush1.msra.mxu0 %v382
        %410 = vmatprep.subr.mxu0 %v381
        %411 = vmatpush1.msra.mxu0 %v380
        %412 = vmatprep.subr.mxu0 %v379
        %413 = vmatpush1.msra.mxu0 %v378
        %414 = vmatprep.subr.mxu0 %v377
        %415 = vmatpush1.msra.mxu0 %v376
        %416 = vmatprep.subr.mxu0 %v375
        %417 = vmatpush1.msra.mxu0 %v374
        %418 = vmatprep.subr.mxu0 %v373
        %419 = vmatpush1.msra.mxu0 %v372
        %420 = vmatprep.subr.mxu0 %v371
        %421 = vmatpush1.msra.mxu0 %v370
        %422 = vmatprep.subr.mxu0 %v369
        %423 = vmatpush1.msra.mxu0 %v368
        %424 = vmatprep.subr.mxu0 %v367
        %425 = vmatpush1.msra.mxu0 %v366
        %426 = vmatprep.subr.mxu0 %v365
        %427 = vmatpush1.msra.mxu0 %v364
        %428 = vmatprep.subr.mxu0 0.0
        %429 = vmatpush2.msra.mxu0 0.0
        %430 = vmatprep.subr.mxu0 0.0
        %431 = vmatpush2.msra.mxu0 0.0
        %432 = vmatprep.subr.mxu0 0.0
        %433 = vmatpush2.msra.mxu0 0.0
        %434 = vmatprep.subr.mxu0 0.0
        %435 = vmatpush2.msra.mxu0 0.0
        %436 = vmatprep.subr.mxu0 0.0
        %437 = vmatpush2.msra.mxu0 0.0
        %438 = vmatprep.subr.mxu0 0.0
        %439 = vmatpush2.msra.mxu0 0.0
        %440 = vmatprep.subr.mxu0 0.0
        %441 = vmatpush2.msra.mxu0 0.0
        %442 = vmatprep.subr.mxu0 0.0
        %443 = vmatpush2.msra.mxu0 0.0
        %444 = vmatprep.subr.mxu0 0.0
        %445 = vmatpush2.msra.mxu0 0.0
        %446 = vmatprep.subr.mxu0 0.0
        %447 = vmatpush2.msra.mxu0 0.0
        %448 = vmatprep.subr.mxu0 0.0
        %449 = vmatpush2.msra.mxu0 0.0
        %450 = vmatprep.subr.mxu0 0.0
        %451 = vmatpush2.msra.mxu0 0.0
        %452 = vmatprep.subr.mxu0 0.0
        %453 = vmatpush2.msra.mxu0 0.0
        %454 = vmatprep.subr.mxu0 0.0
        %455 = vmatpush2.msra.mxu0 0.0
        %456 = vmatprep.subr.mxu0 0.0
        %457 = vmatpush2.msra.mxu0 0.0
        %458 = vmatprep.subr.mxu0 0.0
        %459 = vmatpush2.msra.mxu0 0.0
        %460 = vmatprep.mubr.f32.mxu0 0.0
        %461 = vmatmul.mubr.f32.gmra.mxu0 %v363
        %v462 = vpop.f32.mrf.mxu0
        %v463 = vadd.f32 0.0, %v462
        %v464 = vpop.f32.mrf.mxu0
        %v465 = vadd.f32 0.0, %v464
        %466 = vdwg.mxu0
        %v467 = vld [vmem:[%s336] sm:$0xff]
        %v468 = vld [vmem:[%s340] sm:$0x3]
        %469 = vset.pattern.permute.xlu0 0
        %470 = vperm.xlu0 %469, %v467
        %v471 = vpop.permute.xlu0 %470
        %v472 = vlaneseq
        %v473 = vshrl.u32 %v472, 7
        %v474 = vsub.s32 0, %v473
        %v475 = vrot.slane %v468, %v474
        %v476 = vlaneseq
        %v477 = vshrl.u32 %v476, 7
        %v478 = vsub.s32 1, %v477
        %v479 = vrot.slane %v468, %v478
        %vm480 = vcmp.eq.s32.totalorder %v471, %v475
        %vm481 = vcmp.eq.s32.totalorder %v471, %v479
        %v482 = vsel %vm480, 1, 0
        %v483 = vsel %vm481, 1, 0
        %v484 = vcvt.s32.f32 %v482
        %v485 = vcvt.s32.f32 %v483
        %v486 = vld [vmem:[#allocation4] sm:$0xff]
        %v487 = vmax.f32 %v463, %v465
        %488 = vmax.xlane.f32.xlu0 %v487
        %v489 = vpop.xlane.xlu0 %488
        %v490 = vmax.f32 %v486, %v489
        %v491 = vld [vmem:[#allocation5] sm:$0xff]
        %v492 = vsub.f32 %v486, %v490
        %v493 = vmul.f32 %v492, 1.442695
        %v494 = vpow.pop %v493
        %v495 = vmul.f32 %v491, %v494
        %497 = vset.pattern.permute.xlu0 0
        %498 = vperm.xlu0 %497, %v490
        %v499 = vpop.permute.xlu0 %498
        %v501 = vsub.f32 %v463, %v499
        %v502 = vsub.f32 %v465, %v499
        %v503 = vmul.f32 %v501, 1.442695
        %v504 = vpow.pop %v503
        %v505 = vmul.f32 %v502, 1.442695
        %v506 = vpow.pop %v505
        %v507 = vadd.f32 %v504, %v506
        %508 = vadd.xlane.f32.xlu0 %v507
        %v509 = vpop.xlane.xlu0 %508
        %v510 = vadd.f32 %v495, %v509
        %vm511 = vcmask 7168
        %512 = vst.msk [vmem:[#allocation5] sm:$0xff] %vm511, %v510
        %513 = vst.msk [vmem:[#allocation4] sm:$0xff] %vm511, %v490
        %v514 = vld [vmem:[#allocation6] sm:$0xff]
        %v515 = vadd.f32 %v484, %v485
        %516 = vadd.xlane.f32.xlu0 %v515
        %v517 = vpop.xlane.xlu0 %516
        %v518 = vadd.f32 %v514, %v517
        %519 = vst.msk [vmem:[#allocation6] sm:$0xff] %vm511, %v518
        %v520 = vld [vmem:[#allocation7] sm:$0xff]
        %v521 = vmul.f32 %v484, %v463
        %v522 = vmul.f32 %v485, %v465
        %v523 = vadd.f32 %v521, %v522
        %524 = vadd.xlane.f32.xlu0 %v523
        %v525 = vpop.xlane.xlu0 %524
        %v526 = vadd.f32 %v520, %v525
        %527 = vst.msk [vmem:[#allocation7] sm:$0xff] %vm511, %v526
        %p528 = scmp.eq.s32.totalorder %s27, 1
        // Predicated region
        $region53: #{tpu_custom_call.1} parent=39 // pred_check
          %p529 = pneg %p528
        $region54: #{tpu_custom_call.1} parent=39 // pred_check_branch
          %531 = sbr.rel (%p529) target = $region56
        $region55: #{tpu_custom_call.1} parent=39 // pred_region
          %v532 = vld [vmem:[#allocation4] sm:$0xff]
          %v533 = vld [vmem:[#allocation5] sm:$0xff]
          %v534 = vlog2.pop %v533
          %v535 = vmul.f32 %v534, 0.6931472
          %v536 = vadd.f32 %v532, %v535
          %v537 = vld [vmem:[#allocation6] sm:$0xff]
          %v538 = vld [vmem:[#allocation3] sm:$0xff]
          %v539 = vsub.f32 %v538, %v536
          %v540 = vld [vmem:[#allocation7] sm:$0xff]
          %v541 = vadd.f32 %v539, %v540
          %v542 = vmul.f32 %v536, %v537
          %v543 = vsub.f32 %v541, %v542
          %v544 = vsub.f32 0.0, %v543
          %v545 = vadd.f32 %v537, 1.0
          %v546 = vrcp.pop %v545
          %v547 = vmul.f32 %v544, %v546
          %548 = vst.msk [vmem:[%s345] sm:$0xff] %vm511, %v547
        $region56: #{tpu_custom_call.1} parent=39 // pred_fallthru
          _
        %p549 = scmp.lt.s32.totalorder %s26, 1
        %s550 = scalar_select %p549, %s26, 1
        %s551 = smul.addr %s550, 8
        %s552 = scalar_lea.vmem %s5, %s551
        // Predicated region
        $region57: #{tpu_custom_call.1} parent=39 // pred_check
          %p553 = pneg %p182
        $region58: #{tpu_custom_call.1} parent=39 // pred_check_branch
          %555 = sbr.rel (%p553) target = $region60
        $region59: #{tpu_custom_call.1} parent=39 // pred_region
          _
        $region60: #{tpu_custom_call.1} parent=39 // pred_fallthru
          _
      $region40: #{tpu_custom_call.1} parent=5 // pred_fallthru
        _
      %p556 = scmp.le.s32.totalorder 2, %s17
      // Predicated region
      $region61: #{tpu_custom_call.1} parent=5 // pred_check
        %p557 = pneg %p556
      $region62: #{tpu_custom_call.1} parent=5 // pred_check_branch
        %559 = sbr.rel (%p557) target = $region64
      $region63: #{tpu_custom_call.1} parent=5 // pred_region
        %s560 = ssub.s32 %s17, 2
        // Predicated region
        $region65: #{tpu_custom_call.1} parent=63 // pred_check
          %p561 = pneg %p188
        $region66: #{tpu_custom_call.1} parent=63 // pred_check_branch
          %563 = sbr.rel (%p561) target = $region68
        $region67: #{tpu_custom_call.1} parent=63 // pred_region
          %p564 = scmp.lt.s32.totalorder %s28, 1
          %s565 = scalar_select %p564, %s28, 1
          %s566 = smul.addr %s565, 8
          %s567 = scalar_lea.vmem %s5, %s566
        $region68: #{tpu_custom_call.1} parent=63 // pred_fallthru
          _
      $region64: #{tpu_custom_call.1} parent=5 // pred_fallthru
        _
    $region6: #{tpu_custom_call.1} parent=1 // loop_footer
      %s21 = sadd.s32 1, %s17
    $region7: #{tpu_custom_call.1} parent=1 // loop_footer_branch
      %16 = sbr.rel target = $region3
    $region8: #{tpu_custom_call.1} parent=1 // loop_exit
      _
    %568 = vsyncpa [#allocation9], 1
    %s569 = scalar_lea.sflag [#allocation9], 1
    %570 = vsyncpa %s569, 1
    %571 = vsyncpa [#allocation11], 1
    %s572 = scalar_lea.sflag [#allocation11], 1
    %573 = vsyncpa %s572, 1

</llo_original>
